<compile_context>
chip_gen: v6e
topology: v6e:2x2x1
jax: 0.10.0
libtpu: 0.0.40
codegen_flags: <defaults>
</compile_context>

<pallas_src>
import functools

import jax
import jax.numpy as jnp
from jax.experimental import pallas as pl
from jax.experimental.pallas import tpu as pltpu

_MB = 1024 * 1024


def _round_up(x, m):
    return ((x + m - 1) // m) * m


def _device_profile():
    """(vmem_budget_bytes, vmem_limit_bytes, k_align) per TPU generation."""
    kind = ""
    try:
        kind = jax.devices()[0].device_kind.lower()
    except Exception:
        pass
    if "7" in kind:                 # v7x: 64 MiB VMEM per TensorCore, 2x256^2 MXU
        return 22 * _MB, 40 * _MB, 256
    if "6" in kind:                 # v6e: 128 MiB VMEM, 2x256^2 MXU
        return 56 * _MB, 96 * _MB, 256
    if "5" in kind or "4" in kind:  # v5e/v5p/v4: 128 MiB VMEM, 128-wide MXU tiles
        return 56 * _MB, 96 * _MB, 128
    return 20 * _MB, 32 * _MB, 128  # unknown generation: stay conservative


def _pick_tile_n(n, k_pad, d, budget_bytes):
    """Largest TILE_N (multiple of 8) whose f32 working set fits the budget."""
    dl = _round_up(max(d, 1), 128)            # D axis lane-pads to 128 in VMEM
    # Resident codebook + 0.5*|e|^2, double-buffered by the pipeline even though
    # their block index never changes (see TODO on Buffered(1)).
    fixed = 2 * k_pad * dl * 4 + 2 * k_pad * 128 * 4
    # Streamed z in + z_q out (double-buffered) + ~6 live (K_pad, TILE_N)
    # temporaries (cross/score, int32 iota, where-select, one-hot, slack).
    per_row = 4 * dl * 4 + 6 * k_pad * 4 + 64
    n_cap = max(8, _round_up(n, 8))
    for t in (4096, 2048, 1024, 512, 256, 128, 64, 32, 16, 8):
        if fixed + t * per_row <= budget_bytes:
            return min(t, n_cap)
    return min(8, n_cap)


def _vq_kernel(z_ref, e_ref, esqh_ref, zq_ref, idx_ref, counts_ref, sse_ref,
               *, n_total, use_bf16):
    tile_n, _ = z_ref.shape
    k_pad = e_ref.shape[0]

    z = z_ref[...]                                     # (TILE_N, D)  f32
    e = e_ref[...]                                     # (K_pad, D)   f32

    # ---- scores in transposed layout (codebook on sublanes, rows on lanes) --
    # argmin_k |z - e_k|^2  ==  argmax_k ( z . e_k - 0.5*|e_k|^2 )
    if use_bf16:
        cross_t = jax.lax.dot_general(
            e.astype(jnp.bfloat16), z.astype(jnp.bfloat16),
            (((1,), (1,)), ((), ())), preferred_element_type=jnp.float32)
    else:
        cross_t = jax.lax.dot_general(
            e, z, (((1,), (1,)), ((), ())),
            preferred_element_type=jnp.float32)        # (K_pad, TILE_N)
    score_t = cross_t - esqh_ref[...]                  # esqh = 0.5*|e|^2 (prescaled)

    # ---- argmax over codebook axis, first-index tie-break (== torch.argmin) -
    sub_ids = jax.lax.broadcasted_iota(jnp.int32, (k_pad, tile_n), 0)
    s_max = jnp.max(score_t, axis=0, keepdims=True)                 # (1, TILE_N)
    idx_row = jnp.min(jnp.where(score_t >= s_max, sub_ids, k_pad),
                      axis=0, keepdims=True)                        # (1, TILE_N)

    # ---- one-hot with the valid-row mask fused in (ragged last tile) --------
    row0 = pl.program_id(0) * tile_n
    valid_rowf = (row0 + jax.lax.broadcasted_iota(jnp.int32, (1, tile_n), 1)
                  < n_total).astype(jnp.float32)                    # (1, TILE_N)
    enc_t = jnp.where(sub_ids == idx_row, valid_rowf,
                      jnp.float32(0.0))                             # (K_pad, TILE_N)

    # ---- quantized rows via one-hot gather (MXU); invalid columns are zero --
    z_q = jax.lax.dot_general(enc_t, e, (((0,), (0,)), ((), ())),
                              preferred_element_type=jnp.float32)   # (TILE_N, D)

    # ---- per-block statistics (finished in the wrapper; grid stays parallel)
    counts = jnp.sum(enc_t, axis=1)                                 # XLU lane-reduce
    valid_col = (row0 + jax.lax.broadcasted_iota(jnp.int32, (tile_n, 1), 0)
                 < n_total)                                         # (TILE_N, 1)
    diff = jnp.where(valid_col, z_q - z, jnp.float32(0.0))          # NaN/Inf-safe tail
    sse = jnp.sum(diff * diff)

    zq_ref[...] = z_q.astype(zq_ref.dtype)
    idx_ref[...] = idx_row.reshape(1, 1, tile_n)
    counts_ref[...] = counts.reshape(1, 1, k_pad)
    sse_ref[...] = jnp.broadcast_to(sse, (1, 1, 128)).astype(jnp.float32)


def ema_codebook_forward(z, embedding, beta, *, use_bf16_scores=False):
    """z: (..., D) float32, embedding: (K, D) float32.

    Returns (z_q, min_encoding_indices, loss, perplexity) matching the PyTorch
    eval forward (straight-through output value equals the quantized z).
    """
    d = z.shape[-1]
    zf = z.reshape(-1, d).astype(jnp.float32)
    n = zf.shape[0]
    k = embedding.shape[0]
    e = embedding.astype(jnp.float32)

    budget, vmem_limit, k_align = _device_profile()
    k_pad = _round_up(k, k_align)
    tile_n = _pick_tile_n(n, k_pad, d, budget)
    g = pl.cdiv(n, tile_n)

    e_p = e if k_pad == k else jnp.zeros((k_pad, d), jnp.float32).at[:k].set(e)

    # 0.5*|e|^2 pre-scaled & hoisted out of the kernel; padded codebook rows get
    # a huge value so they can never win the argmax.
    e_sqh = 0.5 * jnp.sum(e_p * e_p, axis=1, keepdims=True)          # (K_pad, 1)
    if k_pad != k:
        pad_mask = (jnp.arange(k_pad) >= k)[:, None]
        e_sqh = jnp.where(pad_mask, jnp.float32(1e30), e_sqh)

    kernel = functools.partial(_vq_kernel, n_total=n, use_bf16=use_bf16_scores)

    out_shapes = (
        jax.ShapeDtypeStruct((n, d), jnp.float32),         # z_q (unpadded)
        jax.ShapeDtypeStruct((g, 1, tile_n), jnp.int32),   # indices (lane-dense)
        jax.ShapeDtypeStruct((g, 1, k_pad), jnp.float32),  # per-block code counts
        jax.ShapeDtypeStruct((g, 1, 128), jnp.float32),    # per-block SSE partials
    )
    z_q, idx_b, counts_b, sse_b = pl.pallas_call(
        kernel,
        out_shape=out_shapes,
        grid=(g,),
        in_specs=[
            pl.BlockSpec((tile_n, d), lambda i: (i, 0)),   # z tile (streamed)
            pl.BlockSpec((k_pad, d), lambda i: (0, 0)),    # codebook (resident)
            pl.BlockSpec((k_pad, 1), lambda i: (0, 0)),    # 0.5*|e|^2 (resident)
        ],
        out_specs=(
            pl.BlockSpec((tile_n, d), lambda i: (i, 0)),
            pl.BlockSpec((1, 1, tile_n), lambda i: (i, 0, 0)),
            pl.BlockSpec((1, 1, k_pad), lambda i: (i, 0, 0)),
            pl.BlockSpec((1, 1, 128), lambda i: (i, 0, 0)),
        ),
        compiler_params=pltpu.CompilerParams(
            dimension_semantics=("parallel",),
            vmem_limit_bytes=vmem_limit,
        ),
    )(zf, e_p, e_sqh)

    idx = idx_b.reshape(-1)[:n][:, None].astype(jnp.int32)

    total_sse = jnp.sum(sse_b[:, 0, 0])
    loss = (1.0 + float(beta)) * total_sse / jnp.float32(n * d)

    counts = jnp.sum(counts_b[:, 0, :], axis=0)[:k]                  # (K,)
    avg_probs = counts / jnp.float32(n)
    perplexity = jnp.exp(-jnp.sum(avg_probs * jnp.log(avg_probs + 1e-10)))
    return z_q, idx, loss, perplexity


def _reference(z, embedding, beta):
    """Pure-JAX reference mirroring the PyTorch eval forward."""
    d_dim = z.shape[-1]
    zf = z.reshape(-1, d_dim)
    d = (jnp.sum(zf ** 2, axis=1, keepdims=True)
         + jnp.sum(embedding ** 2, axis=1)
         - 2.0 * zf @ embedding.T)
    idx = jnp.argmin(d, axis=1)
    z_q = embedding[idx]
    loss = (1.0 + beta) * jnp.mean((z_q - zf) ** 2)
    enc = jax.nn.one_hot(idx, embedding.shape[0], dtype=jnp.float32)
    avg = jnp.mean(enc, axis=0)
    perp = jnp.exp(-jnp.sum(avg * jnp.log(avg + 1e-10)))
    return z_q, idx[:, None].astype(jnp.int32), loss, perp


if __name__ == "__main__":
    key = jax.random.PRNGKey(0)
    k_z, k_e = jax.random.split(key)

    B, T = 2, 8               # batch, sequence
    D = 32                    # embedding_dim
    K = 16                    # num_embeddings
    beta = 0.25

    z = jax.random.normal(k_z, (B, T, D), dtype=jnp.float32)
    embedding = jax.random.normal(k_e, (K, D), dtype=jnp.float32)

    z_q, idx, loss, perp = ema_codebook_forward(z, embedding, beta)
    jax.block_until_ready((z_q, idx, loss, perp))

    z_q_ref, idx_ref, loss_ref, perp_ref = _reference(z, embedding, beta)
    assert jnp.allclose(z_q, z_q_ref, atol=1e-5), "z_q mismatch"
    assert jnp.array_equal(idx, idx_ref), "indices mismatch"
    assert jnp.allclose(loss, loss_ref, atol=1e-5), "loss mismatch"
    assert jnp.allclose(perp, perp_ref, atol=1e-4), "perplexity mismatch"

    print("KERNEL_OK")
</pallas_src>

<mosaic_0001>
module attributes {stable_mosaic.version = 11 : i64} {
  func.func @_vq_kernel(%arg0: i32, %arg1: memref<16x32xf32, #tpu.memory_space<vmem>>, %arg2: memref<128x32xf32, #tpu.memory_space<vmem>>, %arg3: memref<128x1xf32, #tpu.memory_space<vmem>>, %arg4: memref<16x32xf32, #tpu.memory_space<vmem>>, %arg5: memref<1x1x16xi32, #tpu.memory_space<vmem>>, %arg6: memref<1x1x128xf32, #tpu.memory_space<vmem>>, %arg7: memref<1x1x128xf32, #tpu.memory_space<vmem>>) attributes {dimension_semantics = [#tpu.dimension_semantics<parallel>], iteration_bounds = array<i64: 1>, scalar_prefetch = 0 : i64, scratch_operands = 0 : i64, tpu.core_type = #tpu.core_type<tc>, window_params = [{transform_indices = @transform_0, window_bounds = array<i64: 16, 32>}, {pipeline_mode = #tpu.pipeline_mode<synchronous>, transform_indices = @transform_1, window_bounds = array<i64: 128, 32>}, {pipeline_mode = #tpu.pipeline_mode<synchronous>, transform_indices = @transform_2, window_bounds = array<i64: 128, 1>}, {transform_indices = @transform_3, window_bounds = array<i64: 16, 32>}, {transform_indices = @transform_4, window_bounds = array<i64: 1, 1, 16>}, {transform_indices = @transform_5, window_bounds = array<i64: 1, 1, 128>}, {transform_indices = @transform_6, window_bounds = array<i64: 1, 1, 128>}]} {
    %c0 = arith.constant 0 : index
    %c0_0 = arith.constant 0 : index
    %0 = vector.load %arg1[%c0, %c0_0] : memref<16x32xf32, #tpu.memory_space<vmem>>, vector<16x32xf32>
    %c0_1 = arith.constant 0 : index
    %c0_2 = arith.constant 0 : index
    %1 = vector.load %arg2[%c0_1, %c0_2] : memref<128x32xf32, #tpu.memory_space<vmem>>, vector<128x32xf32>
    %cst = arith.constant dense<0.000000e+00> : vector<128x16xf32>
    %2 = tpu.matmul %1, %0, %cst {dimension_numbers = #tpu.dot_dimension_numbers<[1], [1], [0], [0], [0, 0, 1, 0], [], []>} : vector<128x32xf32>, vector<16x32xf32>, vector<128x16xf32> -> vector<128x16xf32>
    %c0_3 = arith.constant 0 : index
    %c0_4 = arith.constant 0 : index
    %3 = vector.load %arg3[%c0_3, %c0_4] : memref<128x1xf32, #tpu.memory_space<vmem>>, vector<128x1xf32>
    %4 = vector.broadcast %3 : vector<128x1xf32> to vector<128x16xf32>
    %5 = arith.subf %2, %4 : vector<128x16xf32>
    %6 = tpu.iota {dimensions = array<i32: 0>} : vector<128x16xi32>
    %cst_5 = arith.constant dense<0xFF800000> : vector<16xf32>
    %7 = vector.multi_reduction <maximumf>, %5, %cst_5 [0] : vector<128x16xf32> to vector<16xf32>
    %8 = vector.shape_cast %7 : vector<16xf32> to vector<1x16xf32>
    %9 = vector.broadcast %8 : vector<1x16xf32> to vector<128x16xf32>
    %10 = arith.cmpf oge, %5, %9 : vector<128x16xf32>
    %c128_i32 = arith.constant 128 : i32
    %11 = vector.broadcast %c128_i32 : i32 to vector<128x16xi32>
    %12 = arith.select %10, %6, %11 : vector<128x16xi1>, vector<128x16xi32>
    %cst_6 = arith.constant dense<2147483647> : vector<16xi32>
    %13 = vector.multi_reduction <minsi>, %12, %cst_6 [0] : vector<128x16xi32> to vector<16xi32>
    %14 = vector.shape_cast %13 : vector<16xi32> to vector<1x16xi32>
    %c16_i32 = arith.constant 16 : i32
    %15 = arith.muli %arg0, %c16_i32 : i32
    %16 = tpu.iota {dimensions = array<i32: 1>} : vector<1x16xi32>
    %17 = vector.broadcast %15 : i32 to vector<1x16xi32>
    %18 = arith.addi %17, %16 : vector<1x16xi32>
    %c16_i32_7 = arith.constant 16 : i32
    %19 = vector.broadcast %c16_i32_7 : i32 to vector<1x16xi32>
    %20 = arith.cmpi slt, %18, %19 : vector<1x16xi32>
    %21 = arith.extui %20 : vector<1x16xi1> to vector<1x16xi32>
    %22 = arith.sitofp %21 : vector<1x16xi32> to vector<1x16xf32>
    %23 = vector.broadcast %14 : vector<1x16xi32> to vector<128x16xi32>
    %24 = arith.cmpi eq, %6, %23 : vector<128x16xi32>
    %cst_8 = arith.constant 0.000000e+00 : f32
    %25 = vector.shape_cast %22 : vector<1x16xf32> to vector<1x16xf32>
    %26 = vector.broadcast %25 : vector<1x16xf32> to vector<128x16xf32>
    %27 = vector.broadcast %cst_8 : f32 to vector<128x16xf32>
    %28 = arith.select %24, %26, %27 : vector<128x16xi1>, vector<128x16xf32>
    %cst_9 = arith.constant dense<0.000000e+00> : vector<16x32xf32>
    %29 = tpu.matmul %28, %1, %cst_9 {dimension_numbers = #tpu.dot_dimension_numbers<[0], [0], [1], [1], [0, 1, 1, 1], [], []>} : vector<128x16xf32>, vector<128x32xf32>, vector<16x32xf32> -> vector<16x32xf32>
    %cst_10 = arith.constant dense<0.000000e+00> : vector<128xf32>
    %30 = vector.multi_reduction <add>, %28, %cst_10 [1] : vector<128x16xf32> to vector<128xf32>
    %31 = tpu.iota {dimensions = array<i32: 0>} : vector<16x1xi32>
    %32 = vector.broadcast %15 : i32 to vector<16x1xi32>
    %33 = arith.addi %32, %31 : vector<16x1xi32>
    %c16_i32_11 = arith.constant 16 : i32
    %34 = vector.broadcast %c16_i32_11 : i32 to vector<16x1xi32>
    %35 = arith.cmpi slt, %33, %34 : vector<16x1xi32>
    %36 = arith.subf %29, %0 : vector<16x32xf32>
    %cst_12 = arith.constant 0.000000e+00 : f32
    %37 = vector.shape_cast %35 : vector<16x1xi1> to vector<16x1xi1>
    %38 = vector.broadcast %37 : vector<16x1xi1> to vector<16x32xi1>
    %39 = vector.broadcast %cst_12 : f32 to vector<16x32xf32>
    %40 = arith.select %38, %36, %39 : vector<16x32xi1>, vector<16x32xf32>
    %41 = arith.mulf %40, %40 : vector<16x32xf32>
    %42 = vector.shape_cast %41 : vector<16x32xf32> to vector<1x16x32xf32>
    %cst_13 = arith.constant dense<0.000000e+00> : vector<1xf32>
    %43 = vector.multi_reduction <add>, %42, %cst_13 [1, 2] : vector<1x16x32xf32> to vector<1xf32>
    %44 = vector.shape_cast %43 : vector<1xf32> to vector<1x1x1xf32>
    %45 = vector.extract %44[0, 0, 0] : f32 from vector<1x1x1xf32>
    %c0_14 = arith.constant 0 : index
    %c0_15 = arith.constant 0 : index
    %46 = vector.load %arg4[%c0_14, %c0_15] : memref<16x32xf32, #tpu.memory_space<vmem>>, vector<16x32xf32>
    tpu.vector_store %arg4[%c0_14, %c0_15], %29 {strides = array<i32>} : memref<16x32xf32, #tpu.memory_space<vmem>>, vector<16x32xf32>,
    %47 = vector.shape_cast %14 : vector<1x16xi32> to vector<1x1x16xi32>
    %c0_16 = arith.constant 0 : index
    %c0_17 = arith.constant 0 : index
    %c0_18 = arith.constant 0 : index
    %48 = vector.load %arg5[%c0_16, %c0_17, %c0_18] : memref<1x1x16xi32, #tpu.memory_space<vmem>>, vector<1x1x16xi32>
    tpu.vector_store %arg5[%c0_16, %c0_17, %c0_18], %47 {strides = array<i32>} : memref<1x1x16xi32, #tpu.memory_space<vmem>>, vector<1x1x16xi32>,
    %49 = vector.shape_cast %30 : vector<128xf32> to vector<1x1x128xf32>
    %c0_19 = arith.constant 0 : index
    %c0_20 = arith.constant 0 : index
    %c0_21 = arith.constant 0 : index
    %50 = vector.load %arg6[%c0_19, %c0_20, %c0_21] : memref<1x1x128xf32, #tpu.memory_space<vmem>>, vector<1x1x128xf32>
    tpu.vector_store %arg6[%c0_19, %c0_20, %c0_21], %49 {strides = array<i32>} : memref<1x1x128xf32, #tpu.memory_space<vmem>>, vector<1x1x128xf32>,
    %51 = vector.broadcast %45 : f32 to vector<1x1x128xf32>
    %c0_22 = arith.constant 0 : index
    %c0_23 = arith.constant 0 : index
    %c0_24 = arith.constant 0 : index
    %52 = vector.load %arg7[%c0_22, %c0_23, %c0_24] : memref<1x1x128xf32, #tpu.memory_space<vmem>>, vector<1x1x128xf32>
    tpu.vector_store %arg7[%c0_22, %c0_23, %c0_24], %51 {strides = array<i32>} : memref<1x1x128xf32, #tpu.memory_space<vmem>>, vector<1x1x128xf32>,
    return
  }
  func.func @transform_0(%arg0: i32) -> (i32, i32) {
    %c0_i32 = arith.constant 0 : i32
    %c0_i32_0 = arith.constant 0 : i32
    return %arg0, %c0_i32 : i32, i32
  }
  func.func @transform_1(%arg0: i32) -> (i32, i32) {
    %c0_i32 = arith.constant 0 : i32
    %c0_i32_0 = arith.constant 0 : i32
    %c0_i32_1 = arith.constant 0 : i32
    return %c0_i32, %c0_i32_0 : i32, i32
  }
  func.func @transform_2(%arg0: i32) -> (i32, i32) {
    %c0_i32 = arith.constant 0 : i32
    %c0_i32_0 = arith.constant 0 : i32
    %c0_i32_1 = arith.constant 0 : i32
    return %c0_i32, %c0_i32_0 : i32, i32
  }
  func.func @transform_3(%arg0: i32) -> (i32, i32) {
    %c0_i32 = arith.constant 0 : i32
    %c0_i32_0 = arith.constant 0 : i32
    return %arg0, %c0_i32 : i32, i32
  }
  func.func @transform_4(%arg0: i32) -> (i32, i32, i32) {
    %c0_i32 = arith.constant 0 : i32
    %c0_i32_0 = arith.constant 0 : i32
    %c0_i32_1 = arith.constant 0 : i32
    return %arg0, %c0_i32, %c0_i32_0 : i32, i32, i32
  }
  func.func @transform_5(%arg0: i32) -> (i32, i32, i32) {
    %c0_i32 = arith.constant 0 : i32
    %c0_i32_0 = arith.constant 0 : i32
    %c0_i32_1 = arith.constant 0 : i32
    return %arg0, %c0_i32, %c0_i32_0 : i32, i32, i32
  }
  func.func @transform_6(%arg0: i32) -> (i32, i32, i32) {
    %c0_i32 = arith.constant 0 : i32
    %c0_i32_0 = arith.constant 0 : i32
    %c0_i32_1 = arith.constant 0 : i32
    return %arg0, %c0_i32, %c0_i32_0 : i32, i32, i32
  }
}

</mosaic_0001>

<llo_original>
// kernel: tpu_custom_call.1
$region0: #{tpu_custom_call.1}
  #allocation0 [shape = 'u32[]', space=smem, size = 0x4, offset = 0x4, fixed_abs, tag = 'smem constant byte address 0x4 - core index']
  #allocation1 [shape = 'u32[144,128]{1,0:T(1,128)}', space=vmem, size = 0x12000, scoped, tag = 'internal scratch']
  %s0 = inlined_call_operand.vmem [shape: f32[16,32], index: 0, kind: input, shape index: {}]
  %s1 = inlined_call_operand.vmem [shape: f32[128,32], index: 1, kind: input, shape index: {}]
  %s2 = inlined_call_operand.vmem [shape: f32[128,1], index: 2, kind: input, shape index: {}]
  %s3 = inlined_call_operand.hbm [shape: f32[16,32], index: 3, kind: output, shape index: {0}]
  %s4 = inlined_call_operand.hbm [shape: s32[1,1,16], index: 4, kind: output, shape index: {1}]
  %s5 = inlined_call_operand.hbm [shape: f32[1,1,128], index: 5, kind: output, shape index: {2}]
  %s6 = inlined_call_operand.hbm [shape: f32[1,1,128], index: 6, kind: output, shape index: {3}]
  %7 = xla_tuple %s3, %s4, %s5, %s6
  %s8 = sld [smem:[#allocation0]]
  $region46: #{tpu_custom_call.1} parent=0
    _
  %s10 = ssub.s32 1, %s8
  %s11 = scalar_select 0, %s10, %s8
  $region1: #{tpu_custom_call.1} parent=0
    #allocation2 [shape = 'u8[8192]{0}', space=vmem, size = 0x2000, scoped, tag = 'output window, operand 0, single buffered']
    #allocation3 [shape = 's32[1]{0}', space=sflag, size = 0x4, scoped, tag = 'scoped memory for tpu_custom_call.1']
    #allocation4 [shape = 'u8[512]{0}', space=vmem, size = 0x400, scoped, tag = 'output window, operand 1, single buffered']
    #allocation5 [shape = 's32[1]{0}', space=sflag, size = 0x4, scoped, tag = 'scoped memory for tpu_custom_call.1']
    #allocation6 [shape = 'u8[512]{0}', space=vmem, size = 0x400, scoped, tag = 'output window, operand 2, single buffered']
    #allocation7 [shape = 'u8[512]{0}', space=vmem, size = 0x400, scoped, tag = 'output window, operand 3, single buffered']
    #allocation8 [shape = 's32[1]{0}', space=sflag, size = 0x4, scoped, tag = 'scoped memory for tpu_custom_call.1']
    %12 = vsyncpa [#allocation3], 0
    %13 = vsyncpa [#allocation5], 0
    %14 = vsyncpa [#allocation8], 0
    // Predicated region
    $region2: #{tpu_custom_call.1} parent=1 // pred_check
      _
    $region3: #{tpu_custom_call.1} parent=1 // pred_check_branch
      %16 = sbr.rel (0) target = $region5
    $region4: #{tpu_custom_call.1} parent=1 // pred_region
      _
    $region5: #{tpu_custom_call.1} parent=1 // pred_fallthru
      _
    // Predicated region
    $region6: #{tpu_custom_call.1} parent=1 // pred_check
      _
    $region7: #{tpu_custom_call.1} parent=1 // pred_check_branch
      %18 = sbr.rel (0) target = $region9
    $region8: #{tpu_custom_call.1} parent=1 // pred_region
      _
    $region9: #{tpu_custom_call.1} parent=1 // pred_fallthru
      _
    // Predicated region
    $region10: #{tpu_custom_call.1} parent=1 // pred_check
      _
    $region11: #{tpu_custom_call.1} parent=1 // pred_check_branch
      %20 = sbr.rel (0) target = $region13
    $region12: #{tpu_custom_call.1} parent=1 // pred_region
      _
    $region13: #{tpu_custom_call.1} parent=1 // pred_fallthru
      _
    %v21 = vld [vmem:[%s0] sm:$0xff]
    %v22 = vld [vmem:[%s0 + $0x8] sm:$0xff]
    %v23 = vld [vmem:[%s1] sm:$0xff]
    %v24 = vld [vmem:[%s1 + $0x8] sm:$0xff]
    %v25 = vld [vmem:[%s1 + $0x10] sm:$0xff]
    %v26 = vld [vmem:[%s1 + $0x18] sm:$0xff]
    %v27 = vld [vmem:[%s1 + $0x20] sm:$0xff]
    %v28 = vld [vmem:[%s1 + $0x28] sm:$0xff]
    %v29 = vld [vmem:[%s1 + $0x30] sm:$0xff]
    %v30 = vld [vmem:[%s1 + $0x38] sm:$0xff]
    %v31 = vld [vmem:[%s1 + $0x40] sm:$0xff]
    %v32 = vld [vmem:[%s1 + $0x48] sm:$0xff]
    %v33 = vld [vmem:[%s1 + $0x50] sm:$0xff]
    %v34 = vld [vmem:[%s1 + $0x58] sm:$0xff]
    %v35 = vld [vmem:[%s1 + $0x60] sm:$0xff]
    %v36 = vld [vmem:[%s1 + $0x68] sm:$0xff]
    %v37 = vld [vmem:[%s1 + $0x70] sm:$0xff]
    %v38 = vld [vmem:[%s1 + $0x78] sm:$0xff]
    %vm39 = vcmask 261120
    %v41 = vsel %vm39, %v23, 0
    %v44 = vsel %vm39, %v24, 0
    %v47 = vsel %vm39, %v25, 0
    %v50 = vsel %vm39, %v26, 0
    %v53 = vsel %vm39, %v27, 0
    %v56 = vsel %vm39, %v28, 0
    %v59 = vsel %vm39, %v29, 0
    %v62 = vsel %vm39, %v30, 0
    %v65 = vsel %vm39, %v31, 0
    %v68 = vsel %vm39, %v32, 0
    %v71 = vsel %vm39, %v33, 0
    %v74 = vsel %vm39, %v34, 0
    %v77 = vsel %vm39, %v35, 0
    %v80 = vsel %vm39, %v36, 0
    %v83 = vsel %vm39, %v37, 0
    %v86 = vsel %vm39, %v38, 0
    %v89 = vsel %vm39, %v21, 0
    %v92 = vsel %vm39, %v22, 0
    %94 = vmatprep.subr.mxu0 0.0
    %95 = vmatpush1.xpose.msra.mxu0 0.0
    %96 = vmatprep.subr.mxu0 0.0
    %97 = vmatpush1.xpose.msra.mxu0 0.0
    %98 = vmatprep.subr.mxu0 0.0
    %99 = vmatpush1.xpose.msra.mxu0 0.0
    %100 = vmatprep.subr.mxu0 0.0
    %101 = vmatpush1.xpose.msra.mxu0 0.0
    %102 = vmatprep.subr.mxu0 0.0
    %103 = vmatpush1.xpose.msra.mxu0 0.0
    %104 = vmatprep.subr.mxu0 0.0
    %105 = vmatpush1.xpose.msra.mxu0 0.0
    %106 = vmatprep.subr.mxu0 0.0
    %107 = vmatpush1.xpose.msra.mxu0 0.0
    %108 = vmatprep.subr.mxu0 0.0
    %109 = vmatpush1.xpose.msra.mxu0 0.0
    %110 = vmatprep.subr.mxu0 0.0
    %111 = vmatpush1.xpose.msra.mxu0 0.0
    %112 = vmatprep.subr.mxu0 0.0
    %113 = vmatpush1.xpose.msra.mxu0 0.0
    %114 = vmatprep.subr.mxu0 0.0
    %115 = vmatpush1.xpose.msra.mxu0 0.0
    %116 = vmatprep.subr.mxu0 0.0
    %117 = vmatpush1.xpose.msra.mxu0 0.0
    %118 = vmatprep.subr.mxu0 0.0
    %119 = vmatpush1.xpose.msra.mxu0 0.0
    %120 = vmatprep.subr.mxu0 0.0
    %121 = vmatpush1.xpose.msra.mxu0 0.0
    %122 = vmatprep.subr.mxu0 0.0
    %123 = vmatpush1.xpose.msra.mxu0 %v92
    %124 = vmatprep.subr.mxu0 0.0
    %125 = vmatpush1.xpose.msra.mxu0 %v89
    %126 = vmatprep.subr.mxu0 0.0
    %127 = vmatpush2.xpose.msra.mxu0 0.0
    %128 = vmatprep.subr.mxu0 0.0
    %129 = vmatpush2.xpose.msra.mxu0 0.0
    %130 = vmatprep.subr.mxu0 0.0
    %131 = vmatpush2.xpose.msra.mxu0 0.0
    %132 = vmatprep.subr.mxu0 0.0
    %133 = vmatpush2.xpose.msra.mxu0 0.0
    %134 = vmatprep.subr.mxu0 0.0
    %135 = vmatpush2.xpose.msra.mxu0 0.0
    %136 = vmatprep.subr.mxu0 0.0
    %137 = vmatpush2.xpose.msra.mxu0 0.0
    %138 = vmatprep.subr.mxu0 0.0
    %139 = vmatpush2.xpose.msra.mxu0 0.0
    %140 = vmatprep.subr.mxu0 0.0
    %141 = vmatpush2.xpose.msra.mxu0 0.0
    %142 = vmatprep.subr.mxu0 0.0
    %143 = vmatpush2.xpose.msra.mxu0 0.0
    %144 = vmatprep.subr.mxu0 0.0
    %145 = vmatpush2.xpose.msra.mxu0 0.0
    %146 = vmatprep.subr.mxu0 0.0
    %147 = vmatpush2.xpose.msra.mxu0 0.0
    %148 = vmatprep.subr.mxu0 0.0
    %149 = vmatpush2.xpose.msra.mxu0 0.0
    %150 = vmatprep.subr.mxu0 0.0
    %151 = vmatpush2.xpose.msra.mxu0 0.0
    %152 = vmatprep.subr.mxu0 0.0
    %153 = vmatpush2.xpose.msra.mxu0 0.0
    %154 = vmatprep.subr.mxu0 0.0
    %155 = vmatpush2.xpose.msra.mxu0 0.0
    %156 = vmatprep.subr.mxu0 0.0
    %157 = vmatpush2.xpose.msra.mxu0 0.0
    %158 = vmatprep.mubr.f32.mxu0 0.0
    %159 = vmatmul.mubr.f32.gmra.mxu0 %v41
    %v160 = vpop.f32.mrf.mxu0
    %v161 = vadd.f32 0.0, %v160
    %v162 = vpop.f32.mrf.mxu0
    %163 = vmatprep.mubr.f32.mxu0 0.0
    %164 = vmatmul.mubr.f32.gmra.mxu0 %v44
    %v165 = vpop.f32.mrf.mxu0
    %v166 = vadd.f32 0.0, %v165
    %v167 = vpop.f32.mrf.mxu0
    %168 = vmatprep.mubr.f32.mxu0 0.0
    %169 = vmatmul.mubr.f32.gmra.mxu0 %v47
    %v170 = vpop.f32.mrf.mxu0
    %v171 = vadd.f32 0.0, %v170
    %v172 = vpop.f32.mrf.mxu0
    %173 = vmatprep.mubr.f32.mxu0 0.0
    %174 = vmatmul.mubr.f32.gmra.mxu0 %v50
    %v175 = vpop.f32.mrf.mxu0
    %v176 = vadd.f32 0.0, %v175
    %v177 = vpop.f32.mrf.mxu0
    %178 = vmatprep.mubr.f32.mxu0 0.0
    %179 = vmatmul.mubr.f32.gmra.mxu0 %v53
    %v180 = vpop.f32.mrf.mxu0
    %v181 = vadd.f32 0.0, %v180
    %v182 = vpop.f32.mrf.mxu0
    %183 = vmatprep.mubr.f32.mxu0 0.0
    %184 = vmatmul.mubr.f32.gmra.mxu0 %v56
    %v185 = vpop.f32.mrf.mxu0
    %v186 = vadd.f32 0.0, %v185
    %v187 = vpop.f32.mrf.mxu0
    %188 = vmatprep.mubr.f32.mxu0 0.0
    %189 = vmatmul.mubr.f32.gmra.mxu0 %v59
    %v190 = vpop.f32.mrf.mxu0
    %v191 = vadd.f32 0.0, %v190
    %v192 = vpop.f32.mrf.mxu0
    %193 = vmatprep.mubr.f32.mxu0 0.0
    %194 = vmatmul.mubr.f32.gmra.mxu0 %v62
    %v195 = vpop.f32.mrf.mxu0
    %v196 = vadd.f32 0.0, %v195
    %v197 = vpop.f32.mrf.mxu0
    %198 = vmatprep.mubr.f32.mxu0 0.0
    %199 = vmatmul.mubr.f32.gmra.mxu0 %v65
    %v200 = vpop.f32.mrf.mxu0
    %v201 = vadd.f32 0.0, %v200
    %v202 = vpop.f32.mrf.mxu0
    %203 = vmatprep.mubr.f32.mxu0 0.0
    %204 = vmatmul.mubr.f32.gmra.mxu0 %v68
    %v205 = vpop.f32.mrf.mxu0
    %v206 = vadd.f32 0.0, %v205
    %v207 = vpop.f32.mrf.mxu0
    %208 = vmatprep.mubr.f32.mxu0 0.0
    %209 = vmatmul.mubr.f32.gmra.mxu0 %v71
    %v210 = vpop.f32.mrf.mxu0
    %v211 = vadd.f32 0.0, %v210
    %v212 = vpop.f32.mrf.mxu0
    %213 = vmatprep.mubr.f32.mxu0 0.0
    %214 = vmatmul.mubr.f32.gmra.mxu0 %v74
    %v215 = vpop.f32.mrf.mxu0
    %v216 = vadd.f32 0.0, %v215
    %v217 = vpop.f32.mrf.mxu0
    %218 = vmatprep.mubr.f32.mxu0 0.0
    %219 = vmatmul.mubr.f32.gmra.mxu0 %v77
    %v220 = vpop.f32.mrf.mxu0
    %v221 = vadd.f32 0.0, %v220
    %v222 = vpop.f32.mrf.mxu0
    %223 = vmatprep.mubr.f32.mxu0 0.0
    %224 = vmatmul.mubr.f32.gmra.mxu0 %v80
    %v225 = vpop.f32.mrf.mxu0
    %v226 = vadd.f32 0.0, %v225
    %v227 = vpop.f32.mrf.mxu0
    %228 = vmatprep.mubr.f32.mxu0 0.0
    %229 = vmatmul.mubr.f32.gmra.mxu0 %v83
    %v230 = vpop.f32.mrf.mxu0
    %v231 = vadd.f32 0.0, %v230
    %v232 = vpop.f32.mrf.mxu0
    %233 = vmatprep.mubr.f32.mxu0 0.0
    %234 = vmatmul.mubr.f32.gmra.mxu0 %v86
    %v235 = vpop.f32.mrf.mxu0
    %v236 = vadd.f32 0.0, %v235
    %v237 = vpop.f32.mrf.mxu0
    %238 = vdwg.mxu0
    %v239 = vld [vmem:[%s2] sm:$0xff]
    %v240 = vld [vmem:[%s2 + $0x8] sm:$0xff]
    %v241 = vld [vmem:[%s2 + $0x10] sm:$0xff]
    %v242 = vld [vmem:[%s2 + $0x18] sm:$0xff]
    %v243 = vld [vmem:[%s2 + $0x20] sm:$0xff]
    %v244 = vld [vmem:[%s2 + $0x28] sm:$0xff]
    %v245 = vld [vmem:[%s2 + $0x30] sm:$0xff]
    %v246 = vld [vmem:[%s2 + $0x38] sm:$0xff]
    %v247 = vld [vmem:[%s2 + $0x40] sm:$0xff]
    %v248 = vld [vmem:[%s2 + $0x48] sm:$0xff]
    %v249 = vld [vmem:[%s2 + $0x50] sm:$0xff]
    %v250 = vld [vmem:[%s2 + $0x58] sm:$0xff]
    %v251 = vld [vmem:[%s2 + $0x60] sm:$0xff]
    %v252 = vld [vmem:[%s2 + $0x68] sm:$0xff]
    %v253 = vld [vmem:[%s2 + $0x70] sm:$0xff]
    %v254 = vld [vmem:[%s2 + $0x78] sm:$0xff]
    %256 = vset.pattern.permute.xlu0 0
    %257 = vperm.xlu0 %256, %v239
    %v258 = vpop.permute.xlu0 %257
    %261 = vset.pattern.permute.xlu0 0
    %262 = vperm.xlu0 %261, %v240
    %v263 = vpop.permute.xlu0 %262
    %266 = vset.pattern.permute.xlu0 0
    %267 = vperm.xlu0 %266, %v241
    %v268 = vpop.permute.xlu0 %267
    %271 = vset.pattern.permute.xlu0 0
    %272 = vperm.xlu0 %271, %v242
    %v273 = vpop.permute.xlu0 %272
    %276 = vset.pattern.permute.xlu0 0
    %277 = vperm.xlu0 %276, %v243
    %v278 = vpop.permute.xlu0 %277
    %281 = vset.pattern.permute.xlu0 0
    %282 = vperm.xlu0 %281, %v244
    %v283 = vpop.permute.xlu0 %282
    %286 = vset.pattern.permute.xlu0 0
    %287 = vperm.xlu0 %286, %v245
    %v288 = vpop.permute.xlu0 %287
    %291 = vset.pattern.permute.xlu0 0
    %292 = vperm.xlu0 %291, %v246
    %v293 = vpop.permute.xlu0 %292
    %296 = vset.pattern.permute.xlu0 0
    %297 = vperm.xlu0 %296, %v247
    %v298 = vpop.permute.xlu0 %297
    %301 = vset.pattern.permute.xlu0 0
    %302 = vperm.xlu0 %301, %v248
    %v303 = vpop.permute.xlu0 %302
    %306 = vset.pattern.permute.xlu0 0
    %307 = vperm.xlu0 %306, %v249
    %v308 = vpop.permute.xlu0 %307
    %311 = vset.pattern.permute.xlu0 0
    %312 = vperm.xlu0 %311, %v250
    %v313 = vpop.permute.xlu0 %312
    %316 = vset.pattern.permute.xlu0 0
    %317 = vperm.xlu0 %316, %v251
    %v318 = vpop.permute.xlu0 %317
    %321 = vset.pattern.permute.xlu0 0
    %322 = vperm.xlu0 %321, %v252
    %v323 = vpop.permute.xlu0 %322
    %326 = vset.pattern.permute.xlu0 0
    %327 = vperm.xlu0 %326, %v253
    %v328 = vpop.permute.xlu0 %327
    %331 = vset.pattern.permute.xlu0 0
    %332 = vperm.xlu0 %331, %v254
    %v333 = vpop.permute.xlu0 %332
    %v335 = vsub.f32 %v161, %v258
    %v336 = vsub.f32 %v166, %v263
    %v337 = vsub.f32 %v171, %v268
    %v338 = vsub.f32 %v176, %v273
    %v339 = vsub.f32 %v181, %v278
    %v340 = vsub.f32 %v186, %v283
    %v341 = vsub.f32 %v191, %v288
    %v342 = vsub.f32 %v196, %v293
    %v343 = vsub.f32 %v201, %v298
    %v344 = vsub.f32 %v206, %v303
    %v345 = vsub.f32 %v211, %v308
    %v346 = vsub.f32 %v216, %v313
    %v347 = vsub.f32 %v221, %v318
    %v348 = vsub.f32 %v226, %v323
    %v349 = vsub.f32 %v231, %v328
    %v350 = vsub.f32 %v236, %v333
    %v351 = vlaneseq
    %v352 = vshrl.u32 %v351, 7
    %v353 = vadd.s32 %v352, 8
    %v354 = vadd.s32 %v352, 16
    %v355 = vadd.s32 %v352, 24
    %v356 = vadd.s32 %v352, 32
    %v357 = vadd.s32 %v352, 40
    %v358 = vadd.s32 %v352, 48
    %v359 = vadd.s32 %v352, 56
    %v360 = vadd.s32 %v352, 64
    %v361 = vadd.s32 %v352, 72
    %v362 = vadd.s32 %v352, 80
    %v363 = vadd.s32 %v352, 88
    %v364 = vadd.s32 %v352, 96
    %v365 = vadd.s32 %v352, 104
    %v366 = vadd.s32 %v352, 112
    %v367 = vadd.s32 %v352, 120
    %vm368 = vcmask 130048
    %v369 = vsel %vm368, %v335, -inf
    %v370 = vsel %vm368, %v336, -inf
    %v371 = vsel %vm368, %v337, -inf
    %v372 = vsel %vm368, %v338, -inf
    %v373 = vsel %vm368, %v339, -inf
    %v374 = vmax.f32 %v369, %v373
    %v375 = vsel %vm368, %v340, -inf
    %v376 = vmax.f32 %v370, %v375
    %v377 = vsel %vm368, %v341, -inf
    %v378 = vmax.f32 %v371, %v377
    %v379 = vsel %vm368, %v342, -inf
    %v380 = vmax.f32 %v372, %v379
    %v381 = vsel %vm368, %v343, -inf
    %v382 = vmax.f32 %v374, %v381
    %v383 = vsel %vm368, %v344, -inf
    %v384 = vmax.f32 %v376, %v383
    %v385 = vsel %vm368, %v345, -inf
    %v386 = vmax.f32 %v378, %v385
    %v387 = vsel %vm368, %v346, -inf
    %v388 = vmax.f32 %v380, %v387
    %v389 = vsel %vm368, %v347, -inf
    %v390 = vmax.f32 %v382, %v389
    %v391 = vsel %vm368, %v348, -inf
    %v392 = vmax.f32 %v384, %v391
    %v393 = vsel %vm368, %v349, -inf
    %v394 = vmax.f32 %v386, %v393
    %v395 = vsel %vm368, %v350, -inf
    %v396 = vmax.f32 %v388, %v395
    %v397 = vmax.f32 %v390, %v392
    %v398 = vmax.f32 %v394, %v396
    %v399 = vmax.f32 %v397, %v398
    %v400 = vrot.slane %v399, 4
    %v401 = vmax.f32 %v399, %v400
    %v402 = vrot.slane %v401, 2
    %v403 = vmax.f32 %v401, %v402
    %v404 = vrot.slane %v403, 1
    %v405 = vmax.f32 %v403, %v404
    %vm406 = vcmp.ge.f32.partialorder %v335, %v405
    %vm407 = vcmp.ge.f32.partialorder %v336, %v405
    %vm408 = vcmp.ge.f32.partialorder %v337, %v405
    %vm409 = vcmp.ge.f32.partialorder %v338, %v405
    %vm410 = vcmp.ge.f32.partialorder %v339, %v405
    %vm411 = vcmp.ge.f32.partialorder %v340, %v405
    %vm412 = vcmp.ge.f32.partialorder %v341, %v405
    %vm413 = vcmp.ge.f32.partialorder %v342, %v405
    %vm414 = vcmp.ge.f32.partialorder %v343, %v405
    %vm415 = vcmp.ge.f32.partialorder %v344, %v405
    %vm416 = vcmp.ge.f32.partialorder %v345, %v405
    %vm417 = vcmp.ge.f32.partialorder %v346, %v405
    %vm418 = vcmp.ge.f32.partialorder %v347, %v405
    %vm419 = vcmp.ge.f32.partialorder %v348, %v405
    %vm420 = vcmp.ge.f32.partialorder %v349, %v405
    %vm421 = vcmp.ge.f32.partialorder %v350, %v405
    %v422 = vsel %vm406, %v352, 128
    %v423 = vsel %vm407, %v353, 128
    %v424 = vsel %vm408, %v354, 128
    %v425 = vsel %vm409, %v355, 128
    %v426 = vsel %vm410, %v356, 128
    %v427 = vsel %vm411, %v357, 128
    %v428 = vsel %vm412, %v358, 128
    %v429 = vsel %vm413, %v359, 128
    %v430 = vsel %vm414, %v360, 128
    %v431 = vsel %vm415, %v361, 128
    %v432 = vsel %vm416, %v362, 128
    %v433 = vsel %vm417, %v363, 128
    %v434 = vsel %vm418, %v364, 128
    %v435 = vsel %vm419, %v365, 128
    %v436 = vsel %vm420, %v366, 128
    %v437 = vsel %vm421, %v367, 128
    %v438 = vsel %vm368, %v422, 2147483647
    %v439 = vsel %vm368, %v423, 2147483647
    %v440 = vsel %vm368, %v424, 2147483647
    %v441 = vsel %vm368, %v425, 2147483647
    %v442 = vsel %vm368, %v426, 2147483647
    %vm443 = vcmp.lt.s32.totalorder %v438, %v442
    %v444 = vsel %vm443, %v438, %v442
    %v445 = vsel %vm368, %v427, 2147483647
    %vm446 = vcmp.lt.s32.totalorder %v439, %v445
    %v447 = vsel %vm446, %v439, %v445
    %v448 = vsel %vm368, %v428, 2147483647
    %vm449 = vcmp.lt.s32.totalorder %v440, %v448
    %v450 = vsel %vm449, %v440, %v448
    %v451 = vsel %vm368, %v429, 2147483647
    %vm452 = vcmp.lt.s32.totalorder %v441, %v451
    %v453 = vsel %vm452, %v441, %v451
    %v454 = vsel %vm368, %v430, 2147483647
    %vm455 = vcmp.lt.s32.totalorder %v444, %v454
    %v456 = vsel %vm455, %v444, %v454
    %v457 = vsel %vm368, %v431, 2147483647
    %vm458 = vcmp.lt.s32.totalorder %v447, %v457
    %v459 = vsel %vm458, %v447, %v457
    %v460 = vsel %vm368, %v432, 2147483647
    %vm461 = vcmp.lt.s32.totalorder %v450, %v460
    %v462 = vsel %vm461, %v450, %v460
    %v463 = vsel %vm368, %v433, 2147483647
    %vm464 = vcmp.lt.s32.totalorder %v453, %v463
    %v465 = vsel %vm464, %v453, %v463
    %v466 = vsel %vm368, %v434, 2147483647
    %vm467 = vcmp.lt.s32.totalorder %v456, %v466
    %v468 = vsel %vm467, %v456, %v466
    %v469 = vsel %vm368, %v435, 2147483647
    %vm470 = vcmp.lt.s32.totalorder %v459, %v469
    %v471 = vsel %vm470, %v459, %v469
    %v472 = vsel %vm368, %v436, 2147483647
    %vm473 = vcmp.lt.s32.totalorder %v462, %v472
    %v474 = vsel %vm473, %v462, %v472
    %v475 = vsel %vm368, %v437, 2147483647
    %vm476 = vcmp.lt.s32.totalorder %v465, %v475
    %v477 = vsel %vm476, %v465, %v475
    %vm478 = vcmp.lt.s32.totalorder %v468, %v471
    %v479 = vsel %vm478, %v468, %v471
    %vm480 = vcmp.lt.s32.totalorder %v474, %v477
    %v481 = vsel %vm480, %v474, %v477
    %vm482 = vcmp.lt.s32.totalorder %v479, %v481
    %v483 = vsel %vm482, %v479, %v481
    %v484 = vrot.slane %v483, 4
    %vm485 = vcmp.lt.s32.totalorder %v483, %v484
    %v486 = vsel %vm485, %v483, %v484
    %v487 = vrot.slane %v486, 2
    %vm488 = vcmp.lt.s32.totalorder %v486, %v487
    %v489 = vsel %vm488, %v486, %v487
    %v490 = vrot.slane %v489, 1
    %vm491 = vcmp.lt.s32.totalorder %v489, %v490
    %v492 = vsel %vm491, %v489, %v490
    %s493 = smul.u32 0, 16
    %v494 = vlaneseq
    %v495 = vand.u32 %v494, 127
    %v496 = vstv %s493
    %v497 = vadd.s32 %v496, %v495
    %vm498 = vcmp.lt.s32.totalorder %v497, 16
    %v499 = vsel %vm498, 1, 0
    %v500 = vcvt.s32.f32 %v499
    %vm501 = vcmp.eq.s32.totalorder %v352, %v492
    %vm502 = vcmp.eq.s32.totalorder %v353, %v492
    %vm503 = vcmp.eq.s32.totalorder %v354, %v492
    %vm504 = vcmp.eq.s32.totalorder %v355, %v492
    %vm505 = vcmp.eq.s32.totalorder %v356, %v492
    %vm506 = vcmp.eq.s32.totalorder %v357, %v492
    %vm507 = vcmp.eq.s32.totalorder %v358, %v492
    %vm508 = vcmp.eq.s32.totalorder %v359, %v492
    %vm509 = vcmp.eq.s32.totalorder %v360, %v492
    %vm510 = vcmp.eq.s32.totalorder %v361, %v492
    %vm511 = vcmp.eq.s32.totalorder %v362, %v492
    %vm512 = vcmp.eq.s32.totalorder %v363, %v492
    %vm513 = vcmp.eq.s32.totalorder %v364, %v492
    %vm514 = vcmp.eq.s32.totalorder %v365, %v492
    %vm515 = vcmp.eq.s32.totalorder %v366, %v492
    %vm516 = vcmp.eq.s32.totalorder %v367, %v492
    %v517 = vsel %vm501, %v500, 0.0
    %v518 = vsel %vm502, %v500, 0.0
    %v519 = vsel %vm503, %v500, 0.0
    %v520 = vsel %vm504, %v500, 0.0
    %v521 = vsel %vm505, %v500, 0.0
    %v522 = vsel %vm506, %v500, 0.0
    %v523 = vsel %vm507, %v500, 0.0
    %v524 = vsel %vm508, %v500, 0.0
    %v525 = vsel %vm509, %v500, 0.0
    %v526 = vsel %vm510, %v500, 0.0
    %v527 = vsel %vm511, %v500, 0.0
    %v528 = vsel %vm512, %v500, 0.0
    %v529 = vsel %vm513, %v500, 0.0
    %v530 = vsel %vm514, %v500, 0.0
    %v531 = vsel %vm515, %v500, 0.0
    %v532 = vsel %vm516, %v500, 0.0
    %533 = vxpose.xlu0.b32.start [1/16] %v517, 128
    %534 = vxpose.xlu0.b32.cont [2/16] %v518, 128
    %535 = vxpose.xlu0.b32.cont [3/16] %v519, 128
    %536 = vxpose.xlu0.b32.cont [4/16] %v520, 128
    %537 = vxpose.xlu0.b32.cont [5/16] %v521, 128
    %538 = vxpose.xlu0.b32.cont [6/16] %v522, 128
    %539 = vxpose.xlu0.b32.cont [7/16] %v523, 128
    %540 = vxpose.xlu0.b32.cont [8/16] %v524, 128
    %541 = vxpose.xlu0.b32.cont [9/16] %v525, 128
    %542 = vxpose.xlu0.b32.cont [10/16] %v526, 128
    %543 = vxpose.xlu0.b32.cont [11/16] %v527, 128
    %544 = vxpose.xlu0.b32.cont [12/16] %v528, 128
    %545 = vxpose.xlu0.b32.cont [13/16] %v529, 128
    %546 = vxpose.xlu0.b32.cont [14/16] %v530, 128
    %547 = vxpose.xlu0.b32.cont [15/16] %v531, 128
    %548 = vxpose.xlu0.b32.end [16/16] %v532, 128
    %v549 = vpop.trf.xlu0
    %v550 = vpop.trf.xlu0
    %v551 = vpop.trf.xlu0
    %v552 = vpop.trf.xlu0
    %v553 = vpop.trf.xlu0
    %v554 = vpop.trf.xlu0
    %v555 = vpop.trf.xlu0
    %v556 = vpop.trf.xlu0
    %v557 = vpop.trf.xlu0
    %v558 = vpop.trf.xlu0
    %v559 = vpop.trf.xlu0
    %v560 = vpop.trf.xlu0
    %v561 = vpop.trf.xlu0
    %v562 = vpop.trf.xlu0
    %v563 = vpop.trf.xlu0
    %v564 = vpop.trf.xlu0
    %565 = vmatprep.subr.mxu0 0.0
    %566 = vmatpush1.msra.mxu0 %v38
    %567 = vmatprep.subr.mxu0 0.0
    %568 = vmatpush1.msra.mxu0 %v37
    %569 = vmatprep.subr.mxu0 0.0
    %570 = vmatpush1.msra.mxu0 %v36
    %571 = vmatprep.subr.mxu0 0.0
    %572 = vmatpush1.msra.mxu0 %v35
    %573 = vmatprep.subr.mxu0 0.0
    %574 = vmatpush1.msra.mxu0 %v34
    %575 = vmatprep.subr.mxu0 0.0
    %576 = vmatpush1.msra.mxu0 %v33
    %577 = vmatprep.subr.mxu0 0.0
    %578 = vmatpush1.msra.mxu0 %v32
    %579 = vmatprep.subr.mxu0 0.0
    %580 = vmatpush1.msra.mxu0 %v31
    %581 = vmatprep.subr.mxu0 0.0
    %582 = vmatpush1.msra.mxu0 %v30
    %583 = vmatprep.subr.mxu0 0.0
    %584 = vmatpush1.msra.mxu0 %v29
    %585 = vmatprep.subr.mxu0 0.0
    %586 = vmatpush1.msra.mxu0 %v28
    %587 = vmatprep.subr.mxu0 0.0
    %588 = vmatpush1.msra.mxu0 %v27
    %589 = vmatprep.subr.mxu0 0.0
    %590 = vmatpush1.msra.mxu0 %v26
    %591 = vmatprep.subr.mxu0 0.0
    %592 = vmatpush1.msra.mxu0 %v25
    %593 = vmatprep.subr.mxu0 0.0
    %594 = vmatpush1.msra.mxu0 %v24
    %595 = vmatprep.subr.mxu0 0.0
    %596 = vmatpush1.msra.mxu0 %v23
    %597 = vmatprep.subr.mxu0 0.0
    %598 = vmatpush2.msra.mxu0 0.0
    %599 = vmatprep.subr.mxu0 0.0
    %600 = vmatpush2.msra.mxu0 0.0
    %601 = vmatprep.subr.mxu0 0.0
    %602 = vmatpush2.msra.mxu0 0.0
    %603 = vmatprep.subr.mxu0 0.0
    %604 = vmatpush2.msra.mxu0 0.0
    %605 = vmatprep.subr.mxu0 0.0
    %606 = vmatpush2.msra.mxu0 0.0
    %607 = vmatprep.subr.mxu0 0.0
    %608 = vmatpush2.msra.mxu0 0.0
    %609 = vmatprep.subr.mxu0 0.0
    %610 = vmatpush2.msra.mxu0 0.0
    %611 = vmatprep.subr.mxu0 0.0
    %612 = vmatpush2.msra.mxu0 0.0
    %613 = vmatprep.subr.mxu0 0.0
    %614 = vmatpush2.msra.mxu0 0.0
    %615 = vmatprep.subr.mxu0 0.0
    %616 = vmatpush2.msra.mxu0 0.0
    %617 = vmatprep.subr.mxu0 0.0
    %618 = vmatpush2.msra.mxu0 0.0
    %619 = vmatprep.subr.mxu0 0.0
    %620 = vmatpush2.msra.mxu0 0.0
    %621 = vmatprep.subr.mxu0 0.0
    %622 = vmatpush2.msra.mxu0 0.0
    %623 = vmatprep.subr.mxu0 0.0
    %624 = vmatpush2.msra.mxu0 0.0
    %625 = vmatprep.subr.mxu0 0.0
    %626 = vmatpush2.msra.mxu0 0.0
    %627 = vmatprep.subr.mxu0 0.0
    %628 = vmatpush2.msra.mxu0 0.0
    %629 = vmatprep.mubr.f32.mxu0 0.0
    %630 = vmatmul.mubr.f32.gmra.mxu0 %v549
    %v631 = vpop.f32.mrf.mxu0
    %v632 = vadd.f32 0.0, %v631
    %v633 = vpop.f32.mrf.mxu0
    %634 = vmatprep.mubr.f32.mxu0 0.0
    %635 = vmatmul.mubr.f32.gmra.mxu0 %v550
    %v636 = vpop.f32.mrf.mxu0
    %v637 = vadd.f32 0.0, %v636
    %v638 = vpop.f32.mrf.mxu0
    %639 = vdwg.mxu0
    %v640 = vsel %vm368, %v517, 0.0
    %641 = vadd.xlane.f32.xlu0 %v640
    %v642 = vpop.xlane.xlu0 %641
    %v643 = vsel %vm368, %v518, 0.0
    %644 = vadd.xlane.f32.xlu0 %v643
    %v645 = vpop.xlane.xlu0 %644
    %v646 = vsel %vm368, %v519, 0.0
    %647 = vadd.xlane.f32.xlu0 %v646
    %v648 = vpop.xlane.xlu0 %647
    %v649 = vsel %vm368, %v520, 0.0
    %650 = vadd.xlane.f32.xlu0 %v649
    %v651 = vpop.xlane.xlu0 %650
    %v652 = vsel %vm368, %v521, 0.0
    %653 = vadd.xlane.f32.xlu0 %v652
    %v654 = vpop.xlane.xlu0 %653
    %v655 = vsel %vm368, %v522, 0.0
    %656 = vadd.xlane.f32.xlu0 %v655
    %v657 = vpop.xlane.xlu0 %656
    %v658 = vsel %vm368, %v523, 0.0
    %659 = vadd.xlane.f32.xlu0 %v658
    %v660 = vpop.xlane.xlu0 %659
    %v661 = vsel %vm368, %v524, 0.0
    %662 = vadd.xlane.f32.xlu0 %v661
    %v663 = vpop.xlane.xlu0 %662
    %v664 = vsel %vm368, %v525, 0.0
    %665 = vadd.xlane.f32.xlu0 %v664
    %v666 = vpop.xlane.xlu0 %665
    %v667 = vsel %vm368, %v526, 0.0
    %668 = vadd.xlane.f32.xlu0 %v667
    %v669 = vpop.xlane.xlu0 %668
    %v670 = vsel %vm368, %v527, 0.0
    %671 = vadd.xlane.f32.xlu0 %v670
    %v672 = vpop.xlane.xlu0 %671
    %v673 = vsel %vm368, %v528, 0.0
    %674 = vadd.xlane.f32.xlu0 %v673
    %v675 = vpop.xlane.xlu0 %674
    %v676 = vsel %vm368, %v529, 0.0
    %677 = vadd.xlane.f32.xlu0 %v676
    %v678 = vpop.xlane.xlu0 %677
    %v679 = vsel %vm368, %v530, 0.0
    %680 = vadd.xlane.f32.xlu0 %v679
    %v681 = vpop.xlane.xlu0 %680
    %v682 = vsel %vm368, %v531, 0.0
    %683 = vadd.xlane.f32.xlu0 %v682
    %v684 = vpop.xlane.xlu0 %683
    %v685 = vsel %vm368, %v532, 0.0
    %686 = vadd.xlane.f32.xlu0 %v685
    %v687 = vpop.xlane.xlu0 %686
    %v688 = vadd.s32 %v496, %v352
    %v689 = vadd.s32 %v496, %v353
    %vm690 = vcmp.lt.s32.totalorder %v688, 16
    %vm691 = vcmp.lt.s32.totalorder %v689, 16
    %v692 = vsub.f32 %v632, %v21
    %v693 = vsub.f32 %v637, %v22
    %v694 = vsel %vm690, 1, 0
    %v695 = vsel %vm691, 1, 0
    %vm696 = vcmp.eq.s32.totalorder %v694, 1
    %vm697 = vcmp.eq.s32.totalorder %v695, 1
    %v698 = vsel %vm696, %v692, 0.0
    %v699 = vsel %vm697, %v693, 0.0
    %v700 = vmul.f32 %v698, %v698
    %v701 = vmul.f32 %v699, %v699
    %v702 = vsel %vm39, %v700, 0.0
    %v703 = vsel %vm39, %v701, 0.0
    %v704 = vadd.f32 %v702, %v703
    %705 = vadd.xlane.f32.xlu0 %v704
    %v706 = vpop.xlane.xlu0 %705
    %v707 = vrot.slane %v706, 4
    %v708 = vadd.f32 %v706, %v707
    %v709 = vrot.slane %v708, 2
    %v710 = vadd.f32 %v708, %v709
    %v711 = vrot.slane %v710, 1
    %v712 = vadd.f32 %v710, %v711
    %s713 = vtos %v712
    %714 = vst.msk [vmem:[#allocation2] sm:$0xff] %vm39, %v632
    %715 = vst.msk [vmem:[#allocation2 + $0x8] sm:$0xff] %vm39, %v637
    %vm716 = vcmask 122880
    %717 = vst.msk [vmem:[#allocation4] sm:$0x1] %vm716, %v492
    %v734 = vlaneseq
    %v735 = vshrl.u32 %v734, 7
    %v736 = vsub.s32 %v495, %v735
    %v737 = vrot.slane %v642, %v736
    %v738 = vadd.s32 %v495, 4294967288
    %v739 = vlaneseq
    %v740 = vshrl.u32 %v739, 7
    %v741 = vsub.s32 %v738, %v740
    %v742 = vrot.slane %v645, %v741
    %vm743 = vcmask 130112
    %v744 = vsel %vm743, %v742, %v737
    %v745 = vadd.s32 %v495, 4294967280
    %v746 = vlaneseq
    %v747 = vshrl.u32 %v746, 7
    %v748 = vsub.s32 %v745, %v747
    %v749 = vrot.slane %v648, %v748
    %vm750 = vcmask 195712
    %v751 = vsel %vm750, %v749, %v744
    %v752 = vadd.s32 %v495, 4294967272
    %v753 = vlaneseq
    %v754 = vshrl.u32 %v753, 7
    %v755 = vsub.s32 %v752, %v754
    %v756 = vrot.slane %v651, %v755
    %vm757 = vcmask 261312
    %v758 = vsel %vm757, %v756, %v751
    %v759 = vadd.s32 %v495, 4294967264
    %v760 = vlaneseq
    %v761 = vshrl.u32 %v760, 7
    %v762 = vsub.s32 %v759, %v761
    %v763 = vrot.slane %v654, %v762
    %vm764 = vcmask 326912
    %v765 = vsel %vm764, %v763, %v758
    %v766 = vadd.s32 %v495, 4294967256
    %v767 = vlaneseq
    %v768 = vshrl.u32 %v767, 7
    %v769 = vsub.s32 %v766, %v768
    %v770 = vrot.slane %v657, %v769
    %vm771 = vcmask 392512
    %v772 = vsel %vm771, %v770, %v765
    %v773 = vadd.s32 %v495, 4294967248
    %v774 = vlaneseq
    %v775 = vshrl.u32 %v774, 7
    %v776 = vsub.s32 %v773, %v775
    %v777 = vrot.slane %v660, %v776
    %vm778 = vcmask 458112
    %v779 = vsel %vm778, %v777, %v772
    %v780 = vadd.s32 %v495, 4294967240
    %v781 = vlaneseq
    %v782 = vshrl.u32 %v781, 7
    %v783 = vsub.s32 %v780, %v782
    %v784 = vrot.slane %v663, %v783
    %vm785 = vcmask 523712
    %v786 = vsel %vm785, %v784, %v779
    %v787 = vadd.s32 %v495, 4294967232
    %v788 = vlaneseq
    %v789 = vshrl.u32 %v788, 7
    %v790 = vsub.s32 %v787, %v789
    %v791 = vrot.slane %v666, %v790
    %vm792 = vcmask 589312
    %v793 = vsel %vm792, %v791, %v786
    %v794 = vadd.s32 %v495, 4294967224
    %v795 = vlaneseq
    %v796 = vshrl.u32 %v795, 7
    %v797 = vsub.s32 %v794, %v796
    %v798 = vrot.slane %v669, %v797
    %vm799 = vcmask 654912
    %v800 = vsel %vm799, %v798, %v793
    %v801 = vadd.s32 %v495, 4294967216
    %v802 = vlaneseq
    %v803 = vshrl.u32 %v802, 7
    %v804 = vsub.s32 %v801, %v803
    %v805 = vrot.slane %v672, %v804
    %vm806 = vcmask 720512
    %v807 = vsel %vm806, %v805, %v800
    %v808 = vadd.s32 %v495, 4294967208
    %v809 = vlaneseq
    %v810 = vshrl.u32 %v809, 7
    %v811 = vsub.s32 %v808, %v810
    %v812 = vrot.slane %v675, %v811
    %vm813 = vcmask 786112
    %v814 = vsel %vm813, %v812, %v807
    %v815 = vadd.s32 %v495, 4294967200
    %v816 = vlaneseq
    %v817 = vshrl.u32 %v816, 7
    %v818 = vsub.s32 %v815, %v817
    %v819 = vrot.slane %v678, %v818
    %vm820 = vcmask 851712
    %v821 = vsel %vm820, %v819, %v814
    %v822 = vadd.s32 %v495, 4294967192
    %v823 = vlaneseq
    %v824 = vshrl.u32 %v823, 7
    %v825 = vsub.s32 %v822, %v824
    %v826 = vrot.slane %v681, %v825
    %vm827 = vcmask 917312
    %v828 = vsel %vm827, %v826, %v821
    %v829 = vadd.s32 %v495, 4294967184
    %v830 = vlaneseq
    %v831 = vshrl.u32 %v830, 7
    %v832 = vsub.s32 %v829, %v831
    %v833 = vrot.slane %v684, %v832
    %vm834 = vcmask 982912
    %v835 = vsel %vm834, %v833, %v828
    %v836 = vadd.s32 %v495, 4294967176
    %v837 = vlaneseq
    %v838 = vshrl.u32 %v837, 7
    %v839 = vsub.s32 %v836, %v838
    %v840 = vrot.slane %v687, %v839
    %vm841 = vcmask 1048512
    %v842 = vsel %vm841, %v840, %v835
    %844 = vst [vmem:[#allocation6] sm:$0x1] %v842
    %v845 = vstv %s713
    %846 = vst [vmem:[#allocation7] sm:$0x1] %v845
    // Predicated region
    $region14: #{tpu_custom_call.1} parent=1 // pred_check
      _
    $region15: #{tpu_custom_call.1} parent=1 // pred_check_branch
      %848 = sbr.rel (0) target = $region17
    $region16: #{tpu_custom_call.1} parent=1 // pred_region
      %s850 = ssub.s32 256, 256
      %851 = vsyncadd [#allocation3], %s850
      %s852 = sshll.u32 [#allocation2], 4
      %s853 = int_to_ptr.vmem [resolvable:$true] %s852
      %858 = dma.vmem_to_hbm [thread:$0]  %s853, 256, %s3, [#allocation3], 128, 128, 8
    $region17: #{tpu_custom_call.1} parent=1 // pred_fallthru
      _
    // Predicated region
    $region18: #{tpu_custom_call.1} parent=1 // pred_check
      _
    $region19: #{tpu_custom_call.1} parent=1 // pred_check_branch
      %860 = sbr.rel (0) target = $region21
    $region20: #{tpu_custom_call.1} parent=1 // pred_region
      %s862 = ssub.s32 16, 16
      %863 = vsyncadd [#allocation5], %s862
      %s865 = sshll.u32 [#allocation4], 4
      %s866 = int_to_ptr.vmem [resolvable:$true] %s865
      %868 = dma.vmem_to_hbm [thread:$0]  %s866, 16, %s4, [#allocation5]
    $region21: #{tpu_custom_call.1} parent=1 // pred_fallthru
      _
    // Predicated region
    $region22: #{tpu_custom_call.1} parent=1 // pred_check
      _
    $region23: #{tpu_custom_call.1} parent=1 // pred_check_branch
      %870 = sbr.rel (0) target = $region25
    $region24: #{tpu_custom_call.1} parent=1 // pred_region
      %s872 = ssub.s32 16, 16
      %873 = vsyncadd [#allocation5], %s872
      %s875 = sshll.u32 [#allocation6], 4
      %s876 = int_to_ptr.vmem [resolvable:$true] %s875
      %878 = dma.vmem_to_hbm [thread:$0]  %s876, 16, %s5, [#allocation5]
    $region25: #{tpu_custom_call.1} parent=1 // pred_fallthru
      _
    // Predicated region
    $region26: #{tpu_custom_call.1} parent=1 // pred_check
      _
    $region27: #{tpu_custom_call.1} parent=1 // pred_check_branch
      %880 = sbr.rel (0) target = $region29
    $region28: #{tpu_custom_call.1} parent=1 // pred_region
      %s882 = ssub.s32 16, 16
      %883 = vsyncadd [#allocation8], %s882
      %s885 = sshll.u32 [#allocation7], 4
      %s886 = int_to_ptr.vmem [resolvable:$true] %s885
      %888 = dma.vmem_to_hbm [thread:$0]  %s886, 16, %s6, [#allocation8]
    $region29: #{tpu_custom_call.1} parent=1 // pred_fallthru
      _
    // Predicated region
    $region30: #{tpu_custom_call.1} parent=1 // pred_check
      _
    $region31: #{tpu_custom_call.1} parent=1 // pred_check_branch
      %890 = sbr.rel (0) target = $region33
    $region32: #{tpu_custom_call.1} parent=1 // pred_region
      %891 = dma.done [#allocation3], 256
    $region33: #{tpu_custom_call.1} parent=1 // pred_fallthru
      _
    // Predicated region
    $region34: #{tpu_custom_call.1} parent=1 // pred_check
      _
    $region35: #{tpu_custom_call.1} parent=1 // pred_check_branch
      %893 = sbr.rel (0) target = $region37
    $region36: #{tpu_custom_call.1} parent=1 // pred_region
      %894 = dma.done [#allocation5], 16
    $region37: #{tpu_custom_call.1} parent=1 // pred_fallthru
      _
    // Predicated region
    $region38: #{tpu_custom_call.1} parent=1 // pred_check
      _
    $region39: #{tpu_custom_call.1} parent=1 // pred_check_branch
      %896 = sbr.rel (0) target = $region41
    $region40: #{tpu_custom_call.1} parent=1 // pred_region
      %897 = dma.done [#allocation5], 16
    $region41: #{tpu_custom_call.1} parent=1 // pred_fallthru
      _
    // Predicated region
    $region42: #{tpu_custom_call.1} parent=1 // pred_check
      _
    $region43: #{tpu_custom_call.1} parent=1 // pred_check_branch
      %899 = sbr.rel (0) target = $region45
    $region44: #{tpu_custom_call.1} parent=1 // pred_region
      %900 = dma.done [#allocation8], 16
    $region45: #{tpu_custom_call.1} parent=1 // pred_fallthru
      _
    %901 = vsyncpa [#allocation3], 1
    %902 = vsyncpa [#allocation5], 1
    %903 = vsyncpa [#allocation8], 1

</llo_original>
